<compile_context>
chip_gen: v5e
topology: v5e:2x2
jax: 0.10.0
libtpu: 0.0.40
codegen_flags: <defaults>
</compile_context>

<pallas_src>
from functools import partial

import jax
import jax.numpy as jnp
from jax.experimental import pallas as pl
from jax.experimental.pallas import tpu as pltpu


def _frn_kernel(eps_ref, x_ref, g_ref, b_ref, t_ref, o_ref, *,
                block_rows, inv_hw):
    # x_ref: (block_rows, cols_p)          -- current tile
    # g/b/t_ref: (rows, 1), VMEM-resident  -- sliced per grid step
    # eps_ref: (1,) in SMEM
    i = pl.program_id(0)
    r0 = pl.multiple_of(i * block_rows, block_rows)

    x = x_ref[...].astype(jnp.float32)
    # v2 = mean(x^2) over the true spatial extent (zero padding adds nothing).
    ssq = jnp.sum(x * x, axis=-1, keepdims=True)
    v2 = ssq * inv_hw

    eps = jnp.abs(eps_ref[0])
    x_n = x * jax.lax.rsqrt(v2 + eps)

    g = g_ref[pl.ds(r0, block_rows), :]
    b = b_ref[pl.ds(r0, block_rows), :]
    t = t_ref[pl.ds(r0, block_rows), :]

    y = g * x_n + b
    y = jnp.maximum(y, t)                   # TLU: max(y, tau)
    o_ref[...] = y.astype(o_ref.dtype)


def _pick_block_rows(rows, cols_p, itemsize, max_tile_bytes=4 << 20):
    """Largest legal divisor of `rows` whose x-tile fits the VMEM tile budget.

    Legal = multiple of the sublane packing for the dtype, or the full extent.
    Prefers choices that leave >= 2 grid steps (v7x megacore sharding).
    """
    sub = {4: 8, 2: 16, 1: 32}.get(itemsize, 8)
    cands = [d for d in range(sub, rows + 1, sub) if rows % d == 0]
    cands.append(rows)                       # full extent is always legal
    cands = sorted(set(cands))
    fitting = [d for d in cands if d * cols_p * itemsize <= max_tile_bytes]
    if not fitting:
        # Even the smallest legal block exceeds the budget (huge H*W).
        # TODO(synk): add a second ("arbitrary") grid axis over cols with a
        # two-pass sum-of-squares accumulation for very large spatial sizes.
        return min(cands)
    two_plus = [d for d in fitting if rows // d >= 2]
    return max(two_plus) if two_plus else max(fitting)


def frn_forward(x, gamma, beta, tau, eps):
    """x: (N, C, H, W); gamma/beta/tau: (1, C, 1, 1); eps: scalar array (1,)."""
    N, C, H, W = x.shape
    rows, cols = N * C, H * W

    # Lane-dense spatial axis: pad cols up to a multiple of 128 if needed.
    cols_p = ((cols + 127) // 128) * 128
    x2d = x.reshape(rows, cols)
    if cols_p != cols:
        x2d = jnp.pad(x2d, ((0, 0), (0, cols_p - cols)))

    itemsize = jnp.dtype(x.dtype).itemsize
    block_rows = _pick_block_rows(rows, cols_p, itemsize)

    # Per-row (N*C, 1) parameter columns (broadcast, not tile; glue code).
    g = jnp.broadcast_to(gamma.reshape(1, C), (N, C)).reshape(rows, 1).astype(jnp.float32)
    b = jnp.broadcast_to(beta.reshape(1, C), (N, C)).reshape(rows, 1).astype(jnp.float32)
    t = jnp.broadcast_to(tau.reshape(1, C), (N, C)).reshape(rows, 1).astype(jnp.float32)
    eps = eps.reshape(1).astype(jnp.float32)

    kernel = partial(_frn_kernel, block_rows=block_rows, inv_hw=float(1.0 / cols))

    grid = (rows // block_rows,)
    out2d = pl.pallas_call(
        kernel,
        out_shape=jax.ShapeDtypeStruct((rows, cols_p), x.dtype),
        grid_spec=pltpu.PrefetchScalarGridSpec(
            num_scalar_prefetch=0,
            grid=grid,
            in_specs=[
                pl.BlockSpec(memory_space=pltpu.SMEM),                 # eps
                pl.BlockSpec((block_rows, cols_p), lambda i: (i, 0)),  # x tile
                pl.BlockSpec((rows, 1), lambda i: (0, 0)),             # gamma (resident)
                pl.BlockSpec((rows, 1), lambda i: (0, 0)),             # beta  (resident)
                pl.BlockSpec((rows, 1), lambda i: (0, 0)),             # tau   (resident)
            ],
            out_specs=pl.BlockSpec((block_rows, cols_p), lambda i: (i, 0)),
        ),
        compiler_params=pltpu.CompilerParams(
            dimension_semantics=("parallel",),
            vmem_limit_bytes=48 * 1024 * 1024,
        ),
    )(eps, x2d, g, b, t)

    if cols_p != cols:
        out2d = out2d[:, :cols]
    return out2d.reshape(N, C, H, W)


def frn_reference(x, gamma, beta, tau, eps):
    """Pure-JAX reference mirroring the PyTorch forward."""
    xf = x.astype(jnp.float32)
    v2 = jnp.mean(xf ** 2, axis=(2, 3), keepdims=True)
    xn = xf * jax.lax.rsqrt(v2 + jnp.abs(eps))
    y = gamma * xn + beta
    return jnp.maximum(y, tau).astype(x.dtype)


if __name__ == "__main__":
    key = jax.random.PRNGKey(0)
    N, C, H, W = 2, 4, 16, 16

    # Deterministic parameter init mirroring FRN.__init__ (num_features=C,
    # eps=1e-6, learnable=True, tlu=True): beta=0, gamma=1, tau=0, eps=1e-6.
    gamma = jnp.ones((1, C, 1, 1), jnp.float32)
    beta = jnp.zeros((1, C, 1, 1), jnp.float32)
    tau = jnp.zeros((1, C, 1, 1), jnp.float32)
    eps = jnp.array([1e-6], jnp.float32)

    x = jax.random.normal(key, (N, C, H, W), dtype=jnp.float32)

    out = frn_forward(x, gamma, beta, tau, eps)
    out = jax.block_until_ready(out)

    ref = frn_reference(x, gamma, beta, tau, eps)
    assert out.shape == (N, C, H, W)
    assert jnp.allclose(out, ref, atol=1e-5, rtol=1e-5), (
        f"max abs err {jnp.max(jnp.abs(out - ref))}")

    print("KERNEL_OK")
</pallas_src>

<mosaic_0001>
module attributes {stable_mosaic.version = 11 : i64} {
  func.func @_frn_kernel(%arg0: i32, %arg1: memref<1xf32, #tpu.memory_space<smem>>, %arg2: memref<8x256xf32, #tpu.memory_space<vmem>>, %arg3: memref<8x1xf32, #tpu.memory_space<vmem>>, %arg4: memref<8x1xf32, #tpu.memory_space<vmem>>, %arg5: memref<8x1xf32, #tpu.memory_space<vmem>>, %arg6: memref<8x256xf32, #tpu.memory_space<vmem>>) attributes {dimension_semantics = [#tpu.dimension_semantics<parallel>], iteration_bounds = array<i64: 1>, scalar_prefetch = 0 : i64, scratch_operands = 0 : i64, tpu.core_type = #tpu.core_type<tc>, window_params = [{transform_indices = @transform_0, window_bounds = array<i64: 1>}, {transform_indices = @transform_1, window_bounds = array<i64: 8, 256>}, {pipeline_mode = #tpu.pipeline_mode<synchronous>, transform_indices = @transform_2, window_bounds = array<i64: 8, 1>}, {pipeline_mode = #tpu.pipeline_mode<synchronous>, transform_indices = @transform_3, window_bounds = array<i64: 8, 1>}, {pipeline_mode = #tpu.pipeline_mode<synchronous>, transform_indices = @transform_4, window_bounds = array<i64: 8, 1>}, {transform_indices = @transform_5, window_bounds = array<i64: 8, 256>}]} {
    %c8_i32 = arith.constant 8 : i32
    %0 = arith.muli %arg0, %c8_i32 : i32
    %1 = tpu.assume_multiple %0, 8 : i32
    %c0 = arith.constant 0 : index
    %c0_0 = arith.constant 0 : index
    %2 = vector.load %arg2[%c0, %c0_0] : memref<8x256xf32, #tpu.memory_space<vmem>>, vector<8x256xf32>
    %3 = arith.mulf %2, %2 : vector<8x256xf32>
    %cst = arith.constant dense<0.000000e+00> : vector<8xf32>
    %4 = vector.multi_reduction <add>, %3, %cst [1] : vector<8x256xf32> to vector<8xf32>
    %5 = vector.shape_cast %4 : vector<8xf32> to vector<8x1xf32>
    %cst_1 = arith.constant 3.906250e-03 : f32
    %6 = vector.broadcast %cst_1 : f32 to vector<8x1xf32>
    %7 = arith.mulf %5, %6 : vector<8x1xf32>
    %c0_2 = arith.constant 0 : index
    %8 = memref.load %arg1[%c0_2] : memref<1xf32, #tpu.memory_space<smem>>
    %9 = math.absf %8 : f32
    %10 = vector.broadcast %9 : f32 to vector<8x1xf32>
    %11 = arith.addf %7, %10 : vector<8x1xf32>
    %12 = math.rsqrt %11 : vector<8x1xf32>
    %13 = vector.broadcast %12 : vector<8x1xf32> to vector<8x256xf32>
    %14 = arith.mulf %2, %13 : vector<8x256xf32>
    %15 = arith.index_cast %1 : i32 to index
    %c0_3 = arith.constant 0 : index
    %16 = vector.load %arg3[%15, %c0_3] : memref<8x1xf32, #tpu.memory_space<vmem>>, vector<8x1xf32>
    %17 = arith.index_cast %1 : i32 to index
    %c0_4 = arith.constant 0 : index
    %18 = vector.load %arg4[%17, %c0_4] : memref<8x1xf32, #tpu.memory_space<vmem>>, vector<8x1xf32>
    %19 = arith.index_cast %1 : i32 to index
    %c0_5 = arith.constant 0 : index
    %20 = vector.load %arg5[%19, %c0_5] : memref<8x1xf32, #tpu.memory_space<vmem>>, vector<8x1xf32>
    %21 = vector.broadcast %16 : vector<8x1xf32> to vector<8x256xf32>
    %22 = arith.mulf %21, %14 : vector<8x256xf32>
    %23 = vector.broadcast %18 : vector<8x1xf32> to vector<8x256xf32>
    %24 = arith.addf %22, %23 : vector<8x256xf32>
    %25 = vector.broadcast %20 : vector<8x1xf32> to vector<8x256xf32>
    %26 = arith.maximumf %24, %25 : vector<8x256xf32>
    %c0_6 = arith.constant 0 : index
    %c0_7 = arith.constant 0 : index
    %27 = vector.load %arg6[%c0_6, %c0_7] : memref<8x256xf32, #tpu.memory_space<vmem>>, vector<8x256xf32>
    tpu.vector_store %arg6[%c0_6, %c0_7], %26 {strides = array<i32>} : memref<8x256xf32, #tpu.memory_space<vmem>>, vector<8x256xf32>,
    return
  }
  func.func @transform_0(%arg0: i32) -> i32 {
    %c0_i32 = arith.constant 0 : i32
    %c0_i32_0 = arith.constant 0 : i32
    return %c0_i32 : i32
  }
  func.func @transform_1(%arg0: i32) -> (i32, i32) {
    %c0_i32 = arith.constant 0 : i32
    %c0_i32_0 = arith.constant 0 : i32
    return %arg0, %c0_i32 : i32, i32
  }
  func.func @transform_2(%arg0: i32) -> (i32, i32) {
    %c0_i32 = arith.constant 0 : i32
    %c0_i32_0 = arith.constant 0 : i32
    %c0_i32_1 = arith.constant 0 : i32
    return %c0_i32, %c0_i32_0 : i32, i32
  }
  func.func @transform_3(%arg0: i32) -> (i32, i32) {
    %c0_i32 = arith.constant 0 : i32
    %c0_i32_0 = arith.constant 0 : i32
    %c0_i32_1 = arith.constant 0 : i32
    return %c0_i32, %c0_i32_0 : i32, i32
  }
  func.func @transform_4(%arg0: i32) -> (i32, i32) {
    %c0_i32 = arith.constant 0 : i32
    %c0_i32_0 = arith.constant 0 : i32
    %c0_i32_1 = arith.constant 0 : i32
    return %c0_i32, %c0_i32_0 : i32, i32
  }
  func.func @transform_5(%arg0: i32) -> (i32, i32) {
    %c0_i32 = arith.constant 0 : i32
    %c0_i32_0 = arith.constant 0 : i32
    return %arg0, %c0_i32 : i32, i32
  }
}

</mosaic_0001>

<llo_original>
// kernel: tpu_custom_call.1
$region0: #{tpu_custom_call.1}
  #allocation0 [shape = 'u32[]', space=smem, size = 0x4, offset = 0x4, fixed_abs, tag = 'smem constant byte address 0x4 - core index']
  #allocation1 [shape = 'u32[72,128]{1,0:T(1,128)}', space=vmem, size = 0x9000, scoped, tag = 'internal scratch']
  #allocation2 [shape = 'f32[1]{0:T(128)S(6)}', space=smem, size = 0x200, scoped, tag = 'scoped memory for tpu_custom_call.1']
  %s0 = inlined_call_operand.<no memory space> [shape: f32[1], index: 0, kind: input, shape index: {}]
  %s1 = inlined_call_operand.vmem [shape: f32[8,256], index: 1, kind: input, shape index: {}]
  %s2 = inlined_call_operand.vmem [shape: f32[8,1], index: 2, kind: input, shape index: {}]
  %s3 = inlined_call_operand.vmem [shape: f32[8,1], index: 3, kind: input, shape index: {}]
  %s4 = inlined_call_operand.vmem [shape: f32[8,1], index: 4, kind: input, shape index: {}]
  %s5 = inlined_call_operand.hbm [shape: f32[8,256], index: 5, kind: output, shape index: {}]
  %s6 = sld [smem:[#allocation0]]
  $region30: #{tpu_custom_call.1} parent=0
    _
  %s8 = ssub.s32 1, %s6
  %s9 = scalar_select 0, %s8, %s6
  %10 = sst [smem:[#allocation2]] %s0
  $region1: #{tpu_custom_call.1} parent=0
    #allocation3 [shape = 'u8[8192]{0}', space=vmem, size = 0x2000, scoped, tag = 'output window, operand 0, single buffered']
    #allocation4 [shape = 's32[1]{0}', space=sflag, size = 0x4, scoped, tag = 'scoped memory for tpu_custom_call.1']
    %11 = vsyncpa [#allocation4], 0
    // Predicated region
    $region2: #{tpu_custom_call.1} parent=1 // pred_check
      _
    $region3: #{tpu_custom_call.1} parent=1 // pred_check_branch
      %13 = sbr.rel (0) target = $region5
    $region4: #{tpu_custom_call.1} parent=1 // pred_region
      _
    $region5: #{tpu_custom_call.1} parent=1 // pred_fallthru
      _
    // Predicated region
    $region6: #{tpu_custom_call.1} parent=1 // pred_check
      _
    $region7: #{tpu_custom_call.1} parent=1 // pred_check_branch
      %15 = sbr.rel (0) target = $region9
    $region8: #{tpu_custom_call.1} parent=1 // pred_region
      _
    $region9: #{tpu_custom_call.1} parent=1 // pred_fallthru
      _
    // Predicated region
    $region10: #{tpu_custom_call.1} parent=1 // pred_check
      _
    $region11: #{tpu_custom_call.1} parent=1 // pred_check_branch
      %17 = sbr.rel (0) target = $region13
    $region12: #{tpu_custom_call.1} parent=1 // pred_region
      _
    $region13: #{tpu_custom_call.1} parent=1 // pred_fallthru
      _
    // Predicated region
    $region14: #{tpu_custom_call.1} parent=1 // pred_check
      _
    $region15: #{tpu_custom_call.1} parent=1 // pred_check_branch
      %19 = sbr.rel (0) target = $region17
    $region16: #{tpu_custom_call.1} parent=1 // pred_region
      _
    $region17: #{tpu_custom_call.1} parent=1 // pred_fallthru
      _
    // Predicated region
    $region18: #{tpu_custom_call.1} parent=1 // pred_check
      _
    $region19: #{tpu_custom_call.1} parent=1 // pred_check_branch
      %21 = sbr.rel (0) target = $region21
    $region20: #{tpu_custom_call.1} parent=1 // pred_region
      _
    $region21: #{tpu_custom_call.1} parent=1 // pred_fallthru
      _
    %s22 = smul.u32 0, 8
    %v23 = vld [vmem:[%s1] sm:$0xff]
    %v24 = vld [vmem:[%s1 + $0x8] sm:$0xff]
    %v25 = vmul.f32 %v23, %v23
    %v26 = vmul.f32 %v24, %v24
    %v27 = vadd.f32 %v25, %v26
    %28 = vadd.xlane.f32.xlu0 %v27
    %v29 = vpop.xlane.xlu0 %28
    %v30 = vmul.f32 %v29, 0.00390625
    %s31 = sld [smem:[#allocation2]]
    %s32 = sand.u32 2147483647, %s31
    %v33 = vstv %s32
    %v34 = vadd.f32 %v30, %v33
    %v35 = vrsqrt.pop %v34
    %v36 = vmul.f32 %v35, %v34
    %v37 = vmul.f32 %v36, %v35
    %v38 = vmul.f32 0.5, %v37
    %v39 = vsub.f32 1.5, %v38
    %v40 = vmul.f32 %v35, %v39
    %vm41 = vweird.f32 %v34
    %vm42 = vweird.f32 %v35
    %vm43 = vmor %vm41, %vm42
    %v44 = vsel %vm43, %v35, %v40
    %v45 = vmul.f32 %v23, %v44
    %v46 = vmul.f32 %v24, %v44
    %s47 = scalar_lea.vmem %s2, %s22
    %v48 = vld [vmem:[%s47] sm:$0xff]
    %s49 = scalar_lea.vmem %s3, %s22
    %v50 = vld [vmem:[%s49] sm:$0xff]
    %s51 = scalar_lea.vmem %s4, %s22
    %v52 = vld [vmem:[%s51] sm:$0xff]
    %54 = vset.pattern.permute.xlu0 0
    %55 = vperm.xlu0 %54, %v48
    %v56 = vpop.permute.xlu0 %55
    %v58 = vmul.f32 %v56, %v45
    %v59 = vmul.f32 %v56, %v46
    %61 = vset.pattern.permute.xlu0 0
    %62 = vperm.xlu0 %61, %v50
    %v63 = vpop.permute.xlu0 %62
    %v65 = vadd.f32 %v58, %v63
    %v66 = vadd.f32 %v59, %v63
    %68 = vset.pattern.permute.xlu0 0
    %69 = vperm.xlu0 %68, %v52
    %v70 = vpop.permute.xlu0 %69
    %v72 = vmax.f32 %v65, %v70
    %v73 = vmax.f32 %v66, %v70
    %74 = vst [vmem:[#allocation3] sm:$0xff] %v72
    %75 = vst [vmem:[#allocation3 + $0x8] sm:$0xff] %v73
    // Predicated region
    $region22: #{tpu_custom_call.1} parent=1 // pred_check
      _
    $region23: #{tpu_custom_call.1} parent=1 // pred_check_branch
      %77 = sbr.rel (0) target = $region25
    $region24: #{tpu_custom_call.1} parent=1 // pred_region
      %79 = vsyncadd [#allocation4], 0
      %s81 = sshll.u32 [#allocation3], 4
      %s82 = int_to_ptr.vmem [resolvable:$true] %s81
      %s83 = sshll.u32 %s5, 4
      %s84 = int_to_ptr.hbm [resolvable:$true] %s83
      %86 = dma.vmem_to_hbm [thread:$0]  %s82, 256, %s84, [#allocation4]
    $region25: #{tpu_custom_call.1} parent=1 // pred_fallthru
      _
    // Predicated region
    $region26: #{tpu_custom_call.1} parent=1 // pred_check
      _
    $region27: #{tpu_custom_call.1} parent=1 // pred_check_branch
      %88 = sbr.rel (0) target = $region29
    $region28: #{tpu_custom_call.1} parent=1 // pred_region
      %90 = dma.done [#allocation4], 256
    $region29: #{tpu_custom_call.1} parent=1 // pred_fallthru
      _
    %91 = vsyncpa [#allocation4], 1

</llo_original>
